<compile_context>
chip_gen: v5e
topology: v5e:2x2
jax: 0.10.0
libtpu: 0.0.40
codegen_flags: <defaults>
</compile_context>

<pallas_src>
import jax
import jax.numpy as jnp
from jax.experimental import pallas as pl
from jax.experimental.pallas import tpu as pltpu


def _lane_pad(n):
    return -(-n // 128) * 128


def _ceil_div(a, b):
    return -(-a // b)


def _smallest_divisor_in_range(n, lo, hi):
    """Smallest divisor g of n with lo <= g <= hi, or None."""
    best = None
    d = 1
    while d * d <= n:
        if n % d == 0:
            for cand in (d, n // d):
                if lo <= cand <= hi and (best is None or cand < best):
                    best = cand
        d += 1
    return best


def _make_kernel(g, s, W, precision):
    Ws = s * W

    def kernel(x_ref, e_ref, o_ref):
        # Column (W -> s*W) replication: one MXU matmul against a constant
        # block-diagonal 0/1 matrix.  Contraction K = g*W (lane-dense), exact
        # (single 1.0 coefficient per output, f32 accumulation).
        y = jnp.dot(
            x_ref[...],
            e_ref[...],
            preferred_element_type=jnp.float32,
            precision=precision,
        ).astype(o_ref.dtype)                       # (rblk, g*Ws)
        # Row (H -> s*H) replication: assemble the whole lane-dense output row
        # and issue ONE unmasked full-width store instead of s masked sub-stores.
        pieces = []
        for m in range(g):
            ym = y[:, m * Ws:(m + 1) * Ws]
            pieces.extend([ym] * s)
        out = pieces[0] if len(pieces) == 1 else jnp.concatenate(pieces, axis=-1)
        o_ref[...] = out

    return kernel


def upsample(x, stride=2):
    """Nearest-neighbor upsample of an NCHW tensor by an integer stride."""
    assert x.ndim == 4
    B, C, H, W = x.shape
    s = int(stride)
    if s == 1:
        return x
    # TODO(synk): integer / bool feature maps would need a non-MXU replication path.
    assert jnp.issubdtype(x.dtype, jnp.floating), "float dtypes only"

    Hs, Wup = H * s, W * s
    N = B * C * H                    # input rows in the 2-D (N, W) view
    OC = s * Wup                     # output columns per input row (= s*s*W)
    itemsize = jnp.dtype(x.dtype).itemsize

    # ---- fold g consecutive rows into lanes so in/out tiles are lane-dense ----
    lo = max(1, _ceil_div(128, W))
    g = None
    if lo > 1:
        hi = max(lo, 512 // W)                    # keep e = (g*W, g*s*W) small
        g = _smallest_divisor_in_range(N, lo, hi)
    if g is None:
        g = 1                                     # fallback: unfolded (still correct)
    R = N // g
    gW, gWs, gOC = g * W, g * s * W, g * OC

    xf = x.reshape(R, gW)                         # free row-major view

    # Constant block-diagonal 0/1 column-expansion matrix (g*W, g*s*W):
    #   e[m*W + i, m'*Ws + j] = 1  iff  m == m' and i == j // s
    i_idx = jnp.arange(gW, dtype=jnp.int32)
    c_idx = jnp.arange(gWs, dtype=jnp.int32)
    e = (
        (i_idx[:, None] // W == c_idx[None, :] // (s * W))
        & (i_idx[:, None] % W == (c_idx[None, :] % (s * W)) // s)
    ).astype(x.dtype)

    # ---- per-generation VMEM budget ------------------------------------------
    try:
        phys_vmem = int(pltpu.get_tpu_info().vmem_capacity_bytes)
    except Exception:
        phys_vmem = 64 * 1024 * 1024              # conservative: fits every chip
    vmem_limit = min(96 * 1024 * 1024, int(0.70 * phys_vmem))
    budget = int(0.75 * vmem_limit)               # headroom for compiler scratch

    sub = {4: 8, 2: 16, 1: 32}.get(itemsize, 8)   # sublane packing per dtype
    e_bytes = 2 * (_ceil_div(gW, sub) * sub) * _lane_pad(gWs) * itemsize  # dbl-buf
    per_row = (
        2 * (_lane_pad(gW) + _lane_pad(gOC)) * itemsize   # double-buffered in/out
        + _lane_pad(gWs) * 4                              # f32 dot result
        + _lane_pad(gOC) * itemsize                       # concat staging
    )
    avail = max(per_row * sub, budget - e_bytes)
    rblk_cap = max(sub, (avail // per_row) // sub * sub)

    # ---- row-block sizing: VMEM cap, >=8 grid steps, sublane/M-tile aligned ---
    min_steps = 8                                  # >= 2 steps per v7x TensorCore
    rblk_steps = max(sub, _ceil_div(_ceil_div(R, min_steps), sub) * sub)
    if R <= sub:
        rblk = R                                   # full dim block (always legal)
    else:
        rblk = max(sub, min(rblk_cap, rblk_steps, (R // sub) * sub))
        if rblk >= 256:
            rblk = (rblk // 256) * 256             # MXU M-tile alignment

    precision = (
        jax.lax.Precision.HIGHEST
        if x.dtype == jnp.float32
        else jax.lax.Precision.DEFAULT             # exact for bf16/f16 (0/1 weights)
    )

    out2 = pl.pallas_call(
        _make_kernel(g, s, W, precision),
        out_shape=jax.ShapeDtypeStruct((R, gOC), x.dtype),
        grid=(pl.cdiv(R, rblk),),
        in_specs=[
            pl.BlockSpec((rblk, gW), lambda i: (i, 0)),   # lane-dense row tile
            pl.BlockSpec((gW, gWs), lambda i: (0, 0)),    # constant e, fetched once
        ],
        out_specs=pl.BlockSpec((rblk, gOC), lambda i: (i, 0)),
        compiler_params=pltpu.CompilerParams(
            dimension_semantics=("parallel",),     # v7x: both TCs split the row axis
            vmem_limit_bytes=vmem_limit,
        ),
        cost_estimate=pl.CostEstimate(
            flops=2 * R * gW * gWs,
            transcendentals=0,
            bytes_accessed=(N * W + gW * gWs + N * OC) * itemsize,
        ),
    )(xf, e)

    return out2.reshape(B, C, Hs, Wup)


if __name__ == "__main__":
    key = jax.random.PRNGKey(0)
    B, C, H, W = 2, 4, 16, 16
    stride = 2
    x = jax.random.normal(key, (B, C, H, W), dtype=jnp.float32)

    out = jax.block_until_ready(upsample(x, stride=stride))

    # Reference: same math as torch view(B,C,H,1,W,1).expand(...).view(...)
    ref = jnp.broadcast_to(
        x[:, :, :, None, :, None], (B, C, H, stride, W, stride)
    ).reshape(B, C, H * stride, W * stride)

    assert out.shape == (B, C, H * stride, W * stride)
    assert out.dtype == x.dtype
    assert bool(jnp.allclose(out, ref, atol=1e-6, rtol=1e-6)), (
        "mismatch vs reference nearest-neighbor upsample"
    )
    print("KERNEL_OK")
</pallas_src>

<mosaic_0001>
module attributes {stable_mosaic.version = 11 : i64} {
  func.func @kernel(%arg0: i32, %arg1: memref<8x128xf32, #tpu.memory_space<vmem>>, %arg2: memref<128x256xf32, #tpu.memory_space<vmem>>, %arg3: memref<8x512xf32, #tpu.memory_space<vmem>>) attributes {dimension_semantics = [#tpu.dimension_semantics<parallel>], iteration_bounds = array<i64: 2>, scalar_prefetch = 0 : i64, scratch_operands = 0 : i64, tpu.core_type = #tpu.core_type<tc>, window_params = [{transform_indices = @transform_0, window_bounds = array<i64: 8, 128>}, {pipeline_mode = #tpu.pipeline_mode<synchronous>, transform_indices = @transform_1, window_bounds = array<i64: 128, 256>}, {transform_indices = @transform_2, window_bounds = array<i64: 8, 512>}]} {
    %c0 = arith.constant 0 : index
    %c0_0 = arith.constant 0 : index
    %0 = vector.load %arg1[%c0, %c0_0] : memref<8x128xf32, #tpu.memory_space<vmem>>, vector<8x128xf32>
    %c0_1 = arith.constant 0 : index
    %c0_2 = arith.constant 0 : index
    %1 = vector.load %arg2[%c0_1, %c0_2] : memref<128x256xf32, #tpu.memory_space<vmem>>, vector<128x256xf32>
    %cst = arith.constant dense<0.000000e+00> : vector<8x256xf32>
    %2 = tpu.matmul %0, %1, %cst {dimension_numbers = #tpu.dot_dimension_numbers<[1], [0], [0], [1], [0, 0, 1, 1], [], []>, precision = #tpu.contract_precision<fp32>} : vector<8x128xf32>, vector<128x256xf32>, vector<8x256xf32> -> vector<8x256xf32>
    %3 = vector.extract_strided_slice %2 {offsets = [0, 0], sizes = [8, 32], strides = [1, 1]} : vector<8x256xf32> to vector<8x32xf32>
    %4 = vector.extract_strided_slice %2 {offsets = [0, 32], sizes = [8, 32], strides = [1, 1]} : vector<8x256xf32> to vector<8x32xf32>
    %5 = vector.extract_strided_slice %2 {offsets = [0, 64], sizes = [8, 32], strides = [1, 1]} : vector<8x256xf32> to vector<8x32xf32>
    %6 = vector.extract_strided_slice %2 {offsets = [0, 96], sizes = [8, 32], strides = [1, 1]} : vector<8x256xf32> to vector<8x32xf32>
    %7 = vector.extract_strided_slice %2 {offsets = [0, 128], sizes = [8, 32], strides = [1, 1]} : vector<8x256xf32> to vector<8x32xf32>
    %8 = vector.extract_strided_slice %2 {offsets = [0, 160], sizes = [8, 32], strides = [1, 1]} : vector<8x256xf32> to vector<8x32xf32>
    %9 = vector.extract_strided_slice %2 {offsets = [0, 192], sizes = [8, 32], strides = [1, 1]} : vector<8x256xf32> to vector<8x32xf32>
    %10 = vector.extract_strided_slice %2 {offsets = [0, 224], sizes = [8, 32], strides = [1, 1]} : vector<8x256xf32> to vector<8x32xf32>
    %11 = tpu.concatenate %3, %3, %4, %4, %5, %5, %6, %6, %7, %7, %8, %8, %9, %9, %10, %10 in 1 : vector<8x32xf32>, vector<8x32xf32>, vector<8x32xf32>, vector<8x32xf32>, vector<8x32xf32>, vector<8x32xf32>, vector<8x32xf32>, vector<8x32xf32>, vector<8x32xf32>, vector<8x32xf32>, vector<8x32xf32>, vector<8x32xf32>, vector<8x32xf32>, vector<8x32xf32>, vector<8x32xf32>, vector<8x32xf32> -> vector<8x512xf32>
    %c0_3 = arith.constant 0 : index
    %c0_4 = arith.constant 0 : index
    %12 = vector.load %arg3[%c0_3, %c0_4] : memref<8x512xf32, #tpu.memory_space<vmem>>, vector<8x512xf32>
    tpu.vector_store %arg3[%c0_3, %c0_4], %11 {strides = array<i32>} : memref<8x512xf32, #tpu.memory_space<vmem>>, vector<8x512xf32>,
    return
  }
  func.func @transform_0(%arg0: i32) -> (i32, i32) {
    %c0_i32 = arith.constant 0 : i32
    %c0_i32_0 = arith.constant 0 : i32
    return %arg0, %c0_i32 : i32, i32
  }
  func.func @transform_1(%arg0: i32) -> (i32, i32) {
    %c0_i32 = arith.constant 0 : i32
    %c0_i32_0 = arith.constant 0 : i32
    %c0_i32_1 = arith.constant 0 : i32
    return %c0_i32, %c0_i32_0 : i32, i32
  }
  func.func @transform_2(%arg0: i32) -> (i32, i32) {
    %c0_i32 = arith.constant 0 : i32
    %c0_i32_0 = arith.constant 0 : i32
    return %arg0, %c0_i32 : i32, i32
  }
}

</mosaic_0001>

<llo_original>
// kernel: tpu_custom_call.1
$region0: #{tpu_custom_call.1}
  #allocation0 [shape = 'u32[]', space=smem, size = 0x4, offset = 0x4, fixed_abs, tag = 'smem constant byte address 0x4 - core index']
  #allocation1 [shape = 'u32[72,128]{1,0:T(1,128)}', space=vmem, size = 0x9000, scoped, tag = 'internal scratch']
  %s0 = inlined_call_operand.hbm [shape: f32[16,128], index: 0, kind: input, shape index: {}]
  %s1 = inlined_call_operand.hbm [shape: f32[128,256], index: 1, kind: input, shape index: {}]
  %s2 = inlined_call_operand.hbm [shape: f32[16,512], index: 2, kind: output, shape index: {}]
  %s3 = sld [smem:[#allocation0]]
  $region49: #{tpu_custom_call.1} parent=0
    _
  %s5 = ssub.s32 1, %s3
  %s6 = scalar_select 0, %s5, %s3
  $region1: #{tpu_custom_call.1} parent=0
    #allocation2 [shape = 'u8[8192]{0}', space=vmem, size = 0x2000, scoped, tag = 'input window, operand 0']
    #allocation3 [shape = 's32[2]{0}', space=sflag, size = 0x8, scoped, tag = 'scoped memory for tpu_custom_call.1']
    #allocation4 [shape = 's32[2]{0}', space=sflag, size = 0x8, scoped, tag = 'scoped memory for tpu_custom_call.1']
    #allocation5 [shape = 'u8[131072]{0}', space=vmem, size = 0x20000, scoped, tag = 'input window, operand 1, single buffered']
    #allocation6 [shape = 's32[1]{0}', space=sflag, size = 0x4, scoped, tag = 'scoped memory for tpu_custom_call.1']
    #allocation7 [shape = 'u8[32768]{0}', space=vmem, size = 0x8000, scoped, tag = 'output window, operand 0']
    %7 = vsyncpa [#allocation3], 0
    %s8 = scalar_lea.sflag [#allocation3], 1
    %9 = vsyncpa %s8, 0
    %10 = vsyncpa [#allocation6], 0
    %11 = vsyncpa [#allocation4], 0
    %s12 = scalar_lea.sflag [#allocation4], 1
    %13 = vsyncpa %s12, 0
    loop: start=0, step=1, limit=4
    $region2: #{tpu_custom_call.1} parent=1 // loop_pre_header
      _
    $region3: #{tpu_custom_call.1} parent=1 // loop_header
      %s15 = sphi 0, %s19
      %p16 = scmp.ge.s32.totalorder %s15, 4
      %s25 = sphi 0, %s27
      %s28 = sphi 0, %s25
      %s29 = sphi 0, %s28
      %s45 = sphi 0, %s29
      %s49 = sphi 0, %s49
      %s51 = sphi 0, %s49
      %s52 = sphi 0, %s51
      %s66 = sphi 0, %s52
      %s72 = sphi 0, %s74
      %s75 = sphi 0, %s72
      %s76 = sphi 0, %s75
      %s92 = sphi 0, %s76
    $region4: #{tpu_custom_call.1} parent=1 // loop_header_branch
      %18 = sbr.rel (%p16) target = $region8
    $region5: #{tpu_custom_call.1} parent=1 // loop_body
      %s20 = ssub.s32 %s15, 1
      %s21 = ssub.s32 %s15, 2
      %s22 = sadd.s32 %s15, 1
      %s23 = ssub.s32 %s15, %s22
      %p24 = scmp.eq.s32.totalorder %s23, 0
      %s26 = sadd.s32 %s25, 1
      %s27 = scalar_select %p24, %s25, %s26
      %p30 = pneg %p24
      %p31 = scmp.eq.s32.totalorder %s15, 1
      %p32 = por %p30, %p31
      %p33 = scmp.ne.s32.totalorder %s25, %s28
      %p34 = scmp.eq.s32.totalorder %s15, 0
      %p35 = por %p33, %p34
      %p36 = scmp.ne.s32.totalorder %s25, %s28
      %p37 = scmp.eq.s32.totalorder %s20, 1
      %p38 = por %p36, %p37
      %p39 = scmp.ne.s32.totalorder %s28, %s29
      %p40 = scmp.eq.s32.totalorder %s20, 0
      %p41 = por %p39, %p40
      %p42 = scmp.ne.s32.totalorder %s28, %s29
      %p43 = scmp.eq.s32.totalorder %s21, 1
      %p44 = por %p42, %p43
      %p46 = scmp.ne.s32.totalorder %s29, %s45
      %p47 = scmp.eq.s32.totalorder %s21, 0
      %p48 = por %p46, %p47
      %s50 = sadd.s32 %s49, 1
      %p53 = scmp.eq.s32.totalorder %s15, 1
      %p54 = scmp.ne.s32.totalorder %s49, %s51
      %p55 = scmp.eq.s32.totalorder %s15, 0
      %p56 = por %p54, %p55
      %p57 = scmp.ne.s32.totalorder %s49, %s51
      %p58 = scmp.eq.s32.totalorder %s20, 1
      %p59 = por %p57, %p58
      %p60 = scmp.ne.s32.totalorder %s51, %s52
      %p61 = scmp.eq.s32.totalorder %s20, 0
      %p62 = por %p60, %p61
      %p63 = scmp.ne.s32.totalorder %s51, %s52
      %p64 = scmp.eq.s32.totalorder %s21, 1
      %p65 = por %p63, %p64
      %p67 = scmp.ne.s32.totalorder %s52, %s66
      %p68 = scmp.eq.s32.totalorder %s21, 0
      %p69 = por %p67, %p68
      %s70 = ssub.s32 %s15, %s22
      %p71 = scmp.eq.s32.totalorder %s70, 0
      %s73 = sadd.s32 %s72, 1
      %s74 = scalar_select %p71, %s72, %s73
      %p77 = pneg %p71
      %p78 = scmp.eq.s32.totalorder %s15, 1
      %p79 = por %p77, %p78
      %p80 = scmp.ne.s32.totalorder %s72, %s75
      %p81 = scmp.eq.s32.totalorder %s15, 0
      %p82 = por %p80, %p81
      %p83 = scmp.ne.s32.totalorder %s72, %s75
      %p84 = scmp.eq.s32.totalorder %s20, 1
      %p85 = por %p83, %p84
      %p86 = scmp.ne.s32.totalorder %s75, %s76
      %p87 = scmp.eq.s32.totalorder %s20, 0
      %p88 = por %p86, %p87
      %p89 = scmp.ne.s32.totalorder %s75, %s76
      %p90 = scmp.eq.s32.totalorder %s21, 1
      %p91 = por %p89, %p90
      %p93 = scmp.ne.s32.totalorder %s76, %s92
      %p94 = scmp.eq.s32.totalorder %s21, 0
      %p95 = por %p93, %p94
      %p96 = scmp.le.s32.totalorder 1, %s15
      %p97 = scmp.lt.s32.totalorder %s15, 3
      %p98 = pnand %p96, %p97
      %p99 = pneg %p98
      // Predicated region
      $region9: #{tpu_custom_call.1} parent=5 // pred_check
        _
      $region10: #{tpu_custom_call.1} parent=5 // pred_check_branch
        %101 = sbr.rel (%p98) target = $region12
      $region11: #{tpu_custom_call.1} parent=5 // pred_region
        %s102 = ssub.s32 %s15, 1
        // Predicated region
        $region13: #{tpu_custom_call.1} parent=11 // pred_check
          %p103 = pneg %p62
        $region14: #{tpu_custom_call.1} parent=11 // pred_check_branch
          %105 = sbr.rel (%p103) target = $region16
        $region15: #{tpu_custom_call.1} parent=11 // pred_region
          %107 = vsyncadd [#allocation6], 0
          %s108 = sshll.u32 %s1, 4
          %s109 = int_to_ptr.hbm [resolvable:$true] %s108
          %s110 = sshll.u32 [#allocation5], 4
          %s111 = int_to_ptr.vmem [resolvable:$true] %s110
          %116 = dma.hbm_to_vmem [thread:$0]  %s109, 4096, %s111, [#allocation6], 256, 256, 16
        $region16: #{tpu_custom_call.1} parent=11 // pred_fallthru
          _
      $region12: #{tpu_custom_call.1} parent=5 // pred_fallthru
        _
      %p117 = scmp.lt.s32.totalorder %s15, 2
      // Predicated region
      $region17: #{tpu_custom_call.1} parent=5 // pred_check
        %p118 = pneg %p117
      $region18: #{tpu_custom_call.1} parent=5 // pred_check_branch
        %120 = sbr.rel (%p118) target = $region20
      $region19: #{tpu_custom_call.1} parent=5 // pred_region
        // Predicated region
        $region21: #{tpu_custom_call.1} parent=19 // pred_check
          %p121 = pneg %p35
        $region22: #{tpu_custom_call.1} parent=19 // pred_check_branch
          %123 = sbr.rel (%p121) target = $region24
        $region23: #{tpu_custom_call.1} parent=19 // pred_region
          %s124 = sand.u32 %s25, 1
          %s125 = scalar_lea.sflag [#allocation3], %s124
          %s126 = sand.u32 %s25, 1
          %s127 = smul.addr %s126, 8
          %s128 = scalar_lea.vmem [#allocation2], %s127
          %130 = vsyncadd %s125, 0
          %s131 = smul.addr %s15, 8
          %s132 = scalar_lea.hbm %s0, %s131
          %s134 = sshll.u32 %s132, 4
          %s135 = int_to_ptr.hbm [resolvable:$true] %s134
          %s136 = sshll.u32 %s128, 4
          %s137 = int_to_ptr.vmem [resolvable:$true] %s136
          %139 = dma.hbm_to_vmem [thread:$0]  %s135, 128, %s137, %s125
        $region24: #{tpu_custom_call.1} parent=19 // pred_fallthru
          _
      $region20: #{tpu_custom_call.1} parent=5 // pred_fallthru
        _
      %p140 = scmp.le.s32.totalorder 1, %s15
      %p141 = scmp.lt.s32.totalorder %s15, 3
      %p142 = pnand %p140, %p141
      %p143 = pneg %p142
      // Predicated region
      $region25: #{tpu_custom_call.1} parent=5 // pred_check
        _
      $region26: #{tpu_custom_call.1} parent=5 // pred_check_branch
        %145 = sbr.rel (%p142) target = $region28
      $region27: #{tpu_custom_call.1} parent=5 // pred_region
        %s146 = ssub.s32 %s15, 1
        %s147 = sand.u32 %s28, 1
        %s148 = scalar_lea.sflag [#allocation3], %s147
        %s149 = sand.u32 %s28, 1
        %s150 = smul.addr %s149, 8
        %s151 = scalar_lea.vmem [#allocation2], %s150
        // Predicated region
        $region29: #{tpu_custom_call.1} parent=27 // pred_check
          %p152 = pneg %p41
        $region30: #{tpu_custom_call.1} parent=27 // pred_check_branch
          %154 = sbr.rel (%p152) target = $region32
        $region31: #{tpu_custom_call.1} parent=27 // pred_region
          %156 = dma.done %s148, 128
        $region32: #{tpu_custom_call.1} parent=27 // pred_fallthru
          _
        // Predicated region
        $region33: #{tpu_custom_call.1} parent=27 // pred_check
          %p157 = pneg %p62
        $region34: #{tpu_custom_call.1} parent=27 // pred_check_branch
          %159 = sbr.rel (%p157) target = $region36
        $region35: #{tpu_custom_call.1} parent=27 // pred_region
          %161 = dma.done [#allocation6], 4096
        $region36: #{tpu_custom_call.1} parent=27 // pred_fallthru
          _
        %s162 = sand.u32 %s28, 1
        %s163 = scalar_lea.sflag [#allocation3], %s162
        %s164 = sand.u32 %s28, 1
        %s165 = smul.addr %s164, 8
        %s166 = scalar_lea.vmem [#allocation2], %s165
        %p167 = pneg %p41
        %p168 = pneg %p38
        %p169 = pneg %p62
        %p170 = pneg %p59
        %p171 = pneg %p88
        %p172 = pneg %p85
        %s173 = sand.u32 %s75, 1
        %s174 = scalar_lea.sflag [#allocation4], %s173
        %s175 = sand.u32 %s75, 1
        %s176 = smul.addr %s175, 32
        %s177 = scalar_lea.vmem [#allocation7], %s176
        %v178 = vld [vmem:[%s151] sm:$0xff]
        %v179 = vld [vmem:[#allocation5] sm:$0xff]
        %v180 = vld [vmem:[#allocation5 + $0x8] sm:$0xff]
        %v181 = vld [vmem:[#allocation5 + $0x10] sm:$0xff]
        %v182 = vld [vmem:[#allocation5 + $0x18] sm:$0xff]
        %v183 = vld [vmem:[#allocation5 + $0x20] sm:$0xff]
        %v184 = vld [vmem:[#allocation5 + $0x28] sm:$0xff]
        %v185 = vld [vmem:[#allocation5 + $0x30] sm:$0xff]
        %v186 = vld [vmem:[#allocation5 + $0x38] sm:$0xff]
        %v187 = vld [vmem:[#allocation5 + $0x40] sm:$0xff]
        %v188 = vld [vmem:[#allocation5 + $0x48] sm:$0xff]
        %v189 = vld [vmem:[#allocation5 + $0x50] sm:$0xff]
        %v190 = vld [vmem:[#allocation5 + $0x58] sm:$0xff]
        %v191 = vld [vmem:[#allocation5 + $0x60] sm:$0xff]
        %v192 = vld [vmem:[#allocation5 + $0x68] sm:$0xff]
        %v193 = vld [vmem:[#allocation5 + $0x70] sm:$0xff]
        %v194 = vld [vmem:[#allocation5 + $0x78] sm:$0xff]
        %v195 = vld [vmem:[#allocation5 + $0x80] sm:$0xff]
        %v196 = vld [vmem:[#allocation5 + $0x88] sm:$0xff]
        %v197 = vld [vmem:[#allocation5 + $0x90] sm:$0xff]
        %v198 = vld [vmem:[#allocation5 + $0x98] sm:$0xff]
        %v199 = vld [vmem:[#allocation5 + $0xa0] sm:$0xff]
        %v200 = vld [vmem:[#allocation5 + $0xa8] sm:$0xff]
        %v201 = vld [vmem:[#allocation5 + $0xb0] sm:$0xff]
        %v202 = vld [vmem:[#allocation5 + $0xb8] sm:$0xff]
        %v203 = vld [vmem:[#allocation5 + $0xc0] sm:$0xff]
        %v204 = vld [vmem:[#allocation5 + $0xc8] sm:$0xff]
        %v205 = vld [vmem:[#allocation5 + $0xd0] sm:$0xff]
        %v206 = vld [vmem:[#allocation5 + $0xd8] sm:$0xff]
        %v207 = vld [vmem:[#allocation5 + $0xe0] sm:$0xff]
        %v208 = vld [vmem:[#allocation5 + $0xe8] sm:$0xff]
        %v209 = vld [vmem:[#allocation5 + $0xf0] sm:$0xff]
        %v210 = vld [vmem:[#allocation5 + $0xf8] sm:$0xff]
        %v211 = vand.u32 %v209, 4294901760
        %212 = vmatpush.msra.mxu0 %v211
        %v213 = vand.u32 %v207, 4294901760
        %214 = vmatpush.msra.mxu0 %v213
        %v215 = vand.u32 %v205, 4294901760
        %216 = vmatpush.msra.mxu0 %v215
        %v217 = vand.u32 %v203, 4294901760
        %218 = vmatpush.msra.mxu0 %v217
        %v219 = vand.u32 %v201, 4294901760
        %220 = vmatpush.msra.mxu0 %v219
        %v221 = vand.u32 %v199, 4294901760
        %222 = vmatpush.msra.mxu0 %v221
        %v223 = vand.u32 %v197, 4294901760
        %224 = vmatpush.msra.mxu0 %v223
        %v225 = vand.u32 %v195, 4294901760
        %226 = vmatpush.msra.mxu0 %v225
        %v227 = vand.u32 %v193, 4294901760
        %228 = vmatpush.msra.mxu0 %v227
        %v229 = vand.u32 %v191, 4294901760
        %230 = vmatpush.msra.mxu0 %v229
        %v231 = vand.u32 %v189, 4294901760
        %232 = vmatpush.msra.mxu0 %v231
        %v233 = vand.u32 %v187, 4294901760
        %234 = vmatpush.msra.mxu0 %v233
        %v235 = vand.u32 %v185, 4294901760
        %236 = vmatpush.msra.mxu0 %v235
        %v237 = vand.u32 %v183, 4294901760
        %238 = vmatpush.msra.mxu0 %v237
        %v239 = vand.u32 %v181, 4294901760
        %240 = vmatpush.msra.mxu0 %v239
        %v241 = vand.u32 %v179, 4294901760
        %242 = vmatpush.msra.mxu0 %v241
        %v243 = vand.u32 %v178, 4294901760
        %v244 = vsub.f32 %v178, %v243
        %v245 = vand.u32 %v244, 4294901760
        %v246 = vsub.f32 %v244, %v245
        %v247 = vand.u32 %v246, 4294901760
        %248 = vmatmul.f32.gmra.mxu0 %v247
        %v249 = vpop.f32.mrf.mxu0
        %v250 = vadd.f32 0.0, %v249
        %251 = vdwg.mxu0
        %v252 = vand.u32 %v209, 4294901760
        %v253 = vsub.f32 %v209, %v252
        %v254 = vand.u32 %v253, 4294901760
        %v255 = vsub.f32 %v253, %v254
        %v256 = vand.u32 %v255, 4294901760
        %257 = vmatpush.msra.mxu0 %v256
        %v258 = vand.u32 %v207, 4294901760
        %v259 = vsub.f32 %v207, %v258
        %v260 = vand.u32 %v259, 4294901760
        %v261 = vsub.f32 %v259, %v260
        %v262 = vand.u32 %v261, 4294901760
        %263 = vmatpush.msra.mxu0 %v262
        %v264 = vand.u32 %v205, 4294901760
        %v265 = vsub.f32 %v205, %v264
        %v266 = vand.u32 %v265, 4294901760
        %v267 = vsub.f32 %v265, %v266
        %v268 = vand.u32 %v267, 4294901760
        %269 = vmatpush.msra.mxu0 %v268
        %v270 = vand.u32 %v203, 4294901760
        %v271 = vsub.f32 %v203, %v270
        %v272 = vand.u32 %v271, 4294901760
        %v273 = vsub.f32 %v271, %v272
        %v274 = vand.u32 %v273, 4294901760
        %275 = vmatpush.msra.mxu0 %v274
        %v276 = vand.u32 %v201, 4294901760
        %v277 = vsub.f32 %v201, %v276
        %v278 = vand.u32 %v277, 4294901760
        %v279 = vsub.f32 %v277, %v278
        %v280 = vand.u32 %v279, 4294901760
        %281 = vmatpush.msra.mxu0 %v280
        %v282 = vand.u32 %v199, 4294901760
        %v283 = vsub.f32 %v199, %v282
        %v284 = vand.u32 %v283, 4294901760
        %v285 = vsub.f32 %v283, %v284
        %v286 = vand.u32 %v285, 4294901760
        %287 = vmatpush.msra.mxu0 %v286
        %v288 = vand.u32 %v197, 4294901760
        %v289 = vsub.f32 %v197, %v288
        %v290 = vand.u32 %v289, 4294901760
        %v291 = vsub.f32 %v289, %v290
        %v292 = vand.u32 %v291, 4294901760
        %293 = vmatpush.msra.mxu0 %v292
        %v294 = vand.u32 %v195, 4294901760
        %v295 = vsub.f32 %v195, %v294
        %v296 = vand.u32 %v295, 4294901760
        %v297 = vsub.f32 %v295, %v296
        %v298 = vand.u32 %v297, 4294901760
        %299 = vmatpush.msra.mxu0 %v298
        %v300 = vand.u32 %v193, 4294901760
        %v301 = vsub.f32 %v193, %v300
        %v302 = vand.u32 %v301, 4294901760
        %v303 = vsub.f32 %v301, %v302
        %v304 = vand.u32 %v303, 4294901760
        %305 = vmatpush.msra.mxu0 %v304
        %v306 = vand.u32 %v191, 4294901760
        %v307 = vsub.f32 %v191, %v306
        %v308 = vand.u32 %v307, 4294901760
        %v309 = vsub.f32 %v307, %v308
        %v310 = vand.u32 %v309, 4294901760
        %311 = vmatpush.msra.mxu0 %v310
        %v312 = vand.u32 %v189, 4294901760
        %v313 = vsub.f32 %v189, %v312
        %v314 = vand.u32 %v313, 4294901760
        %v315 = vsub.f32 %v313, %v314
        %v316 = vand.u32 %v315, 4294901760
        %317 = vmatpush.msra.mxu0 %v316
        %v318 = vand.u32 %v187, 4294901760
        %v319 = vsub.f32 %v187, %v318
        %v320 = vand.u32 %v319, 4294901760
        %v321 = vsub.f32 %v319, %v320
        %v322 = vand.u32 %v321, 4294901760
        %323 = vmatpush.msra.mxu0 %v322
        %v324 = vand.u32 %v185, 4294901760
        %v325 = vsub.f32 %v185, %v324
        %v326 = vand.u32 %v325, 4294901760
        %v327 = vsub.f32 %v325, %v326
        %v328 = vand.u32 %v327, 4294901760
        %329 = vmatpush.msra.mxu0 %v328
        %v330 = vand.u32 %v183, 4294901760
        %v331 = vsub.f32 %v183, %v330
        %v332 = vand.u32 %v331, 4294901760
        %v333 = vsub.f32 %v331, %v332
        %v334 = vand.u32 %v333, 4294901760
        %335 = vmatpush.msra.mxu0 %v334
        %v336 = vand.u32 %v181, 4294901760
        %v337 = vsub.f32 %v181, %v336
        %v338 = vand.u32 %v337, 4294901760
        %v339 = vsub.f32 %v337, %v338
        %v340 = vand.u32 %v339, 4294901760
        %341 = vmatpush.msra.mxu0 %v340
        %v342 = vand.u32 %v179, 4294901760
        %v343 = vsub.f32 %v179, %v342
        %v344 = vand.u32 %v343, 4294901760
        %v345 = vsub.f32 %v343, %v344
        %v346 = vand.u32 %v345, 4294901760
        %347 = vmatpush.msra.mxu0 %v346
        %v348 = vand.u32 %v178, 4294901760
        %349 = vmatmul.f32.gmra.mxu0 %v348
        %v350 = vpop.f32.mrf.mxu0
        %v351 = vadd.f32 %v250, %v350
        %352 = vdwg.mxu0
        %v353 = vand.u32 %v209, 4294901760
        %v354 = vsub.f32 %v209, %v353
        %355 = vmatpush.msra.mxu0 %v354
        %v356 = vand.u32 %v207, 4294901760
        %v357 = vsub.f32 %v207, %v356
        %358 = vmatpush.msra.mxu0 %v357
        %v359 = vand.u32 %v205, 4294901760
        %v360 = vsub.f32 %v205, %v359
        %361 = vmatpush.msra.mxu0 %v360
        %v362 = vand.u32 %v203, 4294901760
        %v363 = vsub.f32 %v203, %v362
        %364 = vmatpush.msra.mxu0 %v363
        %v365 = vand.u32 %v201, 4294901760
        %v366 = vsub.f32 %v201, %v365
        %367 = vmatpush.msra.mxu0 %v366
        %v368 = vand.u32 %v199, 4294901760
        %v369 = vsub.f32 %v199, %v368
        %370 = vmatpush.msra.mxu0 %v369
        %v371 = vand.u32 %v197, 4294901760
        %v372 = vsub.f32 %v197, %v371
        %373 = vmatpush.msra.mxu0 %v372
        %v374 = vand.u32 %v195, 4294901760
        %v375 = vsub.f32 %v195, %v374
        %376 = vmatpush.msra.mxu0 %v375
        %v377 = vand.u32 %v193, 4294901760
        %v378 = vsub.f32 %v193, %v377
        %379 = vmatpush.msra.mxu0 %v378
        %v380 = vand.u32 %v191, 4294901760
        %v381 = vsub.f32 %v191, %v380
        %382 = vmatpush.msra.mxu0 %v381
        %v383 = vand.u32 %v189, 4294901760
        %v384 = vsub.f32 %v189, %v383
        %385 = vmatpush.msra.mxu0 %v384
        %v386 = vand.u32 %v187, 4294901760
        %v387 = vsub.f32 %v187, %v386
        %388 = vmatpush.msra.mxu0 %v387
        %v389 = vand.u32 %v185, 4294901760
        %v390 = vsub.f32 %v185, %v389
        %391 = vmatpush.msra.mxu0 %v390
        %v392 = vand.u32 %v183, 4294901760
        %v393 = vsub.f32 %v183, %v392
        %394 = vmatpush.msra.mxu0 %v393
        %v395 = vand.u32 %v181, 4294901760
        %v396 = vsub.f32 %v181, %v395
        %397 = vmatpush.msra.mxu0 %v396
        %v398 = vand.u32 %v179, 4294901760
        %v399 = vsub.f32 %v179, %v398
        %400 = vmatpush.msra.mxu0 %v399
        %v401 = vand.u32 %v178, 4294901760
        %v402 = vsub.f32 %v178, %v401
        %403 = vmatmul.f32.gmra.mxu0 %v402
        %v404 = vpop.f32.mrf.mxu0
        %v405 = vadd.f32 %v351, %v404
        %406 = vdwg.mxu0
        %v407 = vand.u32 %v209, 4294901760
        %408 = vmatpush.msra.mxu0 %v407
        %v409 = vand.u32 %v207, 4294901760
        %410 = vmatpush.msra.mxu0 %v409
        %v411 = vand.u32 %v205, 4294901760
        %412 = vmatpush.msra.mxu0 %v411
        %v413 = vand.u32 %v203, 4294901760
        %414 = vmatpush.msra.mxu0 %v413
        %v415 = vand.u32 %v201, 4294901760
        %416 = vmatpush.msra.mxu0 %v415
        %v417 = vand.u32 %v199, 4294901760
        %418 = vmatpush.msra.mxu0 %v417
        %v419 = vand.u32 %v197, 4294901760
        %420 = vmatpush.msra.mxu0 %v419
        %v421 = vand.u32 %v195, 4294901760
        %422 = vmatpush.msra.mxu0 %v421
        %v423 = vand.u32 %v193, 4294901760
        %424 = vmatpush.msra.mxu0 %v423
        %v425 = vand.u32 %v191, 4294901760
        %426 = vmatpush.msra.mxu0 %v425
        %v427 = vand.u32 %v189, 4294901760
        %428 = vmatpush.msra.mxu0 %v427
        %v429 = vand.u32 %v187, 4294901760
        %430 = vmatpush.msra.mxu0 %v429
        %v431 = vand.u32 %v185, 4294901760
        %432 = vmatpush.msra.mxu0 %v431
        %v433 = vand.u32 %v183, 4294901760
        %434 = vmatpush.msra.mxu0 %v433
        %v435 = vand.u32 %v181, 4294901760
        %436 = vmatpush.msra.mxu0 %v435
        %v437 = vand.u32 %v179, 4294901760
        %438 = vmatpush.msra.mxu0 %v437
        %v439 = vand.u32 %v178, 4294901760
        %v440 = vsub.f32 %v178, %v439
        %v441 = vand.u32 %v440, 4294901760
        %442 = vmatmul.f32.gmra.mxu0 %v441
        %v443 = vpop.f32.mrf.mxu0
        %v444 = vadd.f32 %v405, %v443
        %445 = vdwg.mxu0
        %v446 = vand.u32 %v209, 4294901760
        %v447 = vsub.f32 %v209, %v446
        %v448 = vand.u32 %v447, 4294901760
        %449 = vmatpush.msra.mxu0 %v448
        %v450 = vand.u32 %v207, 4294901760
        %v451 = vsub.f32 %v207, %v450
        %v452 = vand.u32 %v451, 4294901760
        %453 = vmatpush.msra.mxu0 %v452
        %v454 = vand.u32 %v205, 4294901760
        %v455 = vsub.f32 %v205, %v454
        %v456 = vand.u32 %v455, 4294901760
        %457 = vmatpush.msra.mxu0 %v456
        %v458 = vand.u32 %v203, 4294901760
        %v459 = vsub.f32 %v203, %v458
        %v460 = vand.u32 %v459, 4294901760
        %461 = vmatpush.msra.mxu0 %v460
        %v462 = vand.u32 %v201, 4294901760
        %v463 = vsub.f32 %v201, %v462
        %v464 = vand.u32 %v463, 4294901760
        %465 = vmatpush.msra.mxu0 %v464
        %v466 = vand.u32 %v199, 4294901760
        %v467 = vsub.f32 %v199, %v466
        %v468 = vand.u32 %v467, 4294901760
        %469 = vmatpush.msra.mxu0 %v468
        %v470 = vand.u32 %v197, 4294901760
        %v471 = vsub.f32 %v197, %v470
        %v472 = vand.u32 %v471, 4294901760
        %473 = vmatpush.msra.mxu0 %v472
        %v474 = vand.u32 %v195, 4294901760
        %v475 = vsub.f32 %v195, %v474
        %v476 = vand.u32 %v475, 4294901760
        %477 = vmatpush.msra.mxu0 %v476
        %v478 = vand.u32 %v193, 4294901760
        %v479 = vsub.f32 %v193, %v478
        %v480 = vand.u32 %v479, 4294901760
        %481 = vmatpush.msra.mxu0 %v480
        %v482 = vand.u32 %v191, 4294901760
        %v483 = vsub.f32 %v191, %v482
        %v484 = vand.u32 %v483, 4294901760
        %485 = vmatpush.msra.mxu0 %v484
        %v486 = vand.u32 %v189, 4294901760
        %v487 = vsub.f32 %v189, %v486
        %v488 = vand.u32 %v487, 4294901760
        %489 = vmatpush.msra.mxu0 %v488
        %v490 = vand.u32 %v187, 4294901760
        %v491 = vsub.f32 %v187, %v490
        %v492 = vand.u32 %v491, 4294901760
        %493 = vmatpush.msra.mxu0 %v492
        %v494 = vand.u32 %v185, 4294901760
        %v495 = vsub.f32 %v185, %v494
        %v496 = vand.u32 %v495, 4294901760
        %497 = vmatpush.msra.mxu0 %v496
        %v498 = vand.u32 %v183, 4294901760
        %v499 = vsub.f32 %v183, %v498
        %v500 = vand.u32 %v499, 4294901760
        %501 = vmatpush.msra.mxu0 %v500
        %v502 = vand.u32 %v181, 4294901760
        %v503 = vsub.f32 %v181, %v502
        %v504 = vand.u32 %v503, 4294901760
        %505 = vmatpush.msra.mxu0 %v504
        %v506 = vand.u32 %v179, 4294901760
        %v507 = vsub.f32 %v179, %v506
        %v508 = vand.u32 %v507, 4294901760
        %509 = vmatpush.msra.mxu0 %v508
        %v510 = vand.u32 %v178, 4294901760
        %511 = vmatmul.f32.gmra.mxu0 %v510
        %v512 = vpop.f32.mrf.mxu0
        %v513 = vadd.f32 %v444, %v512
        %514 = vdwg.mxu0
        %v515 = vand.u32 %v209, 4294901760
        %516 = vmatpush.msra.mxu0 %v515
        %v517 = vand.u32 %v207, 4294901760
        %518 = vmatpush.msra.mxu0 %v517
        %v519 = vand.u32 %v205, 4294901760
        %520 = vmatpush.msra.mxu0 %v519
        %v521 = vand.u32 %v203, 4294901760
        %522 = vmatpush.msra.mxu0 %v521
        %v523 = vand.u32 %v201, 4294901760
        %524 = vmatpush.msra.mxu0 %v523
        %v525 = vand.u32 %v199, 4294901760
        %526 = vmatpush.msra.mxu0 %v525
        %v527 = vand.u32 %v197, 4294901760
        %528 = vmatpush.msra.mxu0 %v527
        %v529 = vand.u32 %v195, 4294901760
        %530 = vmatpush.msra.mxu0 %v529
        %v531 = vand.u32 %v193, 4294901760
        %532 = vmatpush.msra.mxu0 %v531
        %v533 = vand.u32 %v191, 4294901760
        %534 = vmatpush.msra.mxu0 %v533
        %v535 = vand.u32 %v189, 4294901760
        %536 = vmatpush.msra.mxu0 %v535
        %v537 = vand.u32 %v187, 4294901760
        %538 = vmatpush.msra.mxu0 %v537
        %v539 = vand.u32 %v185, 4294901760
        %540 = vmatpush.msra.mxu0 %v539
        %v541 = vand.u32 %v183, 4294901760
        %542 = vmatpush.msra.mxu0 %v541
        %v543 = vand.u32 %v181, 4294901760
        %544 = vmatpush.msra.mxu0 %v543
        %v545 = vand.u32 %v179, 4294901760
        %546 = vmatpush.msra.mxu0 %v545
        %v547 = vand.u32 %v178, 4294901760
        %548 = vmatmul.f32.gmra.mxu0 %v547
        %v549 = vpop.f32.mrf.mxu0
        %v550 = vadd.f32 %v513, %v549
        %551 = vdwg.mxu0
        %v552 = vand.u32 %v210, 4294901760
        %553 = vmatpush.msra.mxu0 %v552
        %v554 = vand.u32 %v208, 4294901760
        %555 = vmatpush.msra.mxu0 %v554
        %v556 = vand.u32 %v206, 4294901760
        %557 = vmatpush.msra.mxu0 %v556
        %v558 = vand.u32 %v204, 4294901760
        %559 = vmatpush.msra.mxu0 %v558
        %v560 = vand.u32 %v202, 4294901760
        %561 = vmatpush.msra.mxu0 %v560
        %v562 = vand.u32 %v200, 4294901760
        %563 = vmatpush.msra.mxu0 %v562
        %v564 = vand.u32 %v198, 4294901760
        %565 = vmatpush.msra.mxu0 %v564
        %v566 = vand.u32 %v196, 4294901760
        %567 = vmatpush.msra.mxu0 %v566
        %v568 = vand.u32 %v194, 4294901760
        %569 = vmatpush.msra.mxu0 %v568
        %v570 = vand.u32 %v192, 4294901760
        %571 = vmatpush.msra.mxu0 %v570
        %v572 = vand.u32 %v190, 4294901760
        %573 = vmatpush.msra.mxu0 %v572
        %v574 = vand.u32 %v188, 4294901760
        %575 = vmatpush.msra.mxu0 %v574
        %v576 = vand.u32 %v186, 4294901760
        %577 = vmatpush.msra.mxu0 %v576
        %v578 = vand.u32 %v184, 4294901760
        %579 = vmatpush.msra.mxu0 %v578
        %v580 = vand.u32 %v182, 4294901760
        %581 = vmatpush.msra.mxu0 %v580
        %v582 = vand.u32 %v180, 4294901760
        %583 = vmatpush.msra.mxu0 %v582
        %v584 = vand.u32 %v178, 4294901760
        %v585 = vsub.f32 %v178, %v584
        %v586 = vand.u32 %v585, 4294901760
        %v587 = vsub.f32 %v585, %v586
        %v588 = vand.u32 %v587, 4294901760
        %589 = vmatmul.f32.gmra.mxu0 %v588
        %v590 = vpop.f32.mrf.mxu0
        %v591 = vadd.f32 0.0, %v590
        %592 = vdwg.mxu0
        %v593 = vand.u32 %v210, 4294901760
        %v594 = vsub.f32 %v210, %v593
        %v595 = vand.u32 %v594, 4294901760
        %v596 = vsub.f32 %v594, %v595
        %v597 = vand.u32 %v596, 4294901760
        %598 = vmatpush.msra.mxu0 %v597
        %v599 = vand.u32 %v208, 4294901760
        %v600 = vsub.f32 %v208, %v599
        %v601 = vand.u32 %v600, 4294901760
        %v602 = vsub.f32 %v600, %v601
        %v603 = vand.u32 %v602, 4294901760
        %604 = vmatpush.msra.mxu0 %v603
        %v605 = vand.u32 %v206, 4294901760
        %v606 = vsub.f32 %v206, %v605
        %v607 = vand.u32 %v606, 4294901760
        %v608 = vsub.f32 %v606, %v607
        %v609 = vand.u32 %v608, 4294901760
        %610 = vmatpush.msra.mxu0 %v609
        %v611 = vand.u32 %v204, 4294901760
        %v612 = vsub.f32 %v204, %v611
        %v613 = vand.u32 %v612, 4294901760
        %v614 = vsub.f32 %v612, %v613
        %v615 = vand.u32 %v614, 4294901760
        %616 = vmatpush.msra.mxu0 %v615
        %v617 = vand.u32 %v202, 4294901760
        %v618 = vsub.f32 %v202, %v617
        %v619 = vand.u32 %v618, 4294901760
        %v620 = vsub.f32 %v618, %v619
        %v621 = vand.u32 %v620, 4294901760
        %622 = vmatpush.msra.mxu0 %v621
        %v623 = vand.u32 %v200, 4294901760
        %v624 = vsub.f32 %v200, %v623
        %v625 = vand.u32 %v624, 4294901760
        %v626 = vsub.f32 %v624, %v625
        %v627 = vand.u32 %v626, 4294901760
        %628 = vmatpush.msra.mxu0 %v627
        %v629 = vand.u32 %v198, 4294901760
        %v630 = vsub.f32 %v198, %v629
        %v631 = vand.u32 %v630, 4294901760
        %v632 = vsub.f32 %v630, %v631
        %v633 = vand.u32 %v632, 4294901760
        %634 = vmatpush.msra.mxu0 %v633
        %v635 = vand.u32 %v196, 4294901760
        %v636 = vsub.f32 %v196, %v635
        %v637 = vand.u32 %v636, 4294901760
        %v638 = vsub.f32 %v636, %v637
        %v639 = vand.u32 %v638, 4294901760
        %640 = vmatpush.msra.mxu0 %v639
        %v641 = vand.u32 %v194, 4294901760
        %v642 = vsub.f32 %v194, %v641
        %v643 = vand.u32 %v642, 4294901760
        %v644 = vsub.f32 %v642, %v643
        %v645 = vand.u32 %v644, 4294901760
        %646 = vmatpush.msra.mxu0 %v645
        %v647 = vand.u32 %v192, 4294901760
        %v648 = vsub.f32 %v192, %v647
        %v649 = vand.u32 %v648, 4294901760
        %v650 = vsub.f32 %v648, %v649
        %v651 = vand.u32 %v650, 4294901760
        %652 = vmatpush.msra.mxu0 %v651
        %v653 = vand.u32 %v190, 4294901760
        %v654 = vsub.f32 %v190, %v653
        %v655 = vand.u32 %v654, 4294901760
        %v656 = vsub.f32 %v654, %v655
        %v657 = vand.u32 %v656, 4294901760
        %658 = vmatpush.msra.mxu0 %v657
        %v659 = vand.u32 %v188, 4294901760
        %v660 = vsub.f32 %v188, %v659
        %v661 = vand.u32 %v660, 4294901760
        %v662 = vsub.f32 %v660, %v661
        %v663 = vand.u32 %v662, 4294901760
        %664 = vmatpush.msra.mxu0 %v663
        %v665 = vand.u32 %v186, 4294901760
        %v666 = vsub.f32 %v186, %v665
        %v667 = vand.u32 %v666, 4294901760
        %v668 = vsub.f32 %v666, %v667
        %v669 = vand.u32 %v668, 4294901760
        %670 = vmatpush.msra.mxu0 %v669
        %v671 = vand.u32 %v184, 4294901760
        %v672 = vsub.f32 %v184, %v671
        %v673 = vand.u32 %v672, 4294901760
        %v674 = vsub.f32 %v672, %v673
        %v675 = vand.u32 %v674, 4294901760
        %676 = vmatpush.msra.mxu0 %v675
        %v677 = vand.u32 %v182, 4294901760
        %v678 = vsub.f32 %v182, %v677
        %v679 = vand.u32 %v678, 4294901760
        %v680 = vsub.f32 %v678, %v679
        %v681 = vand.u32 %v680, 4294901760
        %682 = vmatpush.msra.mxu0 %v681
        %v683 = vand.u32 %v180, 4294901760
        %v684 = vsub.f32 %v180, %v683
        %v685 = vand.u32 %v684, 4294901760
        %v686 = vsub.f32 %v684, %v685
        %v687 = vand.u32 %v686, 4294901760
        %688 = vmatpush.msra.mxu0 %v687
        %v689 = vand.u32 %v178, 4294901760
        %690 = vmatmul.f32.gmra.mxu0 %v689
        %v691 = vpop.f32.mrf.mxu0
        %v692 = vadd.f32 %v591, %v691
        %693 = vdwg.mxu0
        %v694 = vand.u32 %v210, 4294901760
        %v695 = vsub.f32 %v210, %v694
        %696 = vmatpush.msra.mxu0 %v695
        %v697 = vand.u32 %v208, 4294901760
        %v698 = vsub.f32 %v208, %v697
        %699 = vmatpush.msra.mxu0 %v698
        %v700 = vand.u32 %v206, 4294901760
        %v701 = vsub.f32 %v206, %v700
        %702 = vmatpush.msra.mxu0 %v701
        %v703 = vand.u32 %v204, 4294901760
        %v704 = vsub.f32 %v204, %v703
        %705 = vmatpush.msra.mxu0 %v704
        %v706 = vand.u32 %v202, 4294901760
        %v707 = vsub.f32 %v202, %v706
        %708 = vmatpush.msra.mxu0 %v707
        %v709 = vand.u32 %v200, 4294901760
        %v710 = vsub.f32 %v200, %v709
        %711 = vmatpush.msra.mxu0 %v710
        %v712 = vand.u32 %v198, 4294901760
        %v713 = vsub.f32 %v198, %v712
        %714 = vmatpush.msra.mxu0 %v713
        %v715 = vand.u32 %v196, 4294901760
        %v716 = vsub.f32 %v196, %v715
        %717 = vmatpush.msra.mxu0 %v716
        %v718 = vand.u32 %v194, 4294901760
        %v719 = vsub.f32 %v194, %v718
        %720 = vmatpush.msra.mxu0 %v719
        %v721 = vand.u32 %v192, 4294901760
        %v722 = vsub.f32 %v192, %v721
        %723 = vmatpush.msra.mxu0 %v722
        %v724 = vand.u32 %v190, 4294901760
        %v725 = vsub.f32 %v190, %v724
        %726 = vmatpush.msra.mxu0 %v725
        %v727 = vand.u32 %v188, 4294901760
        %v728 = vsub.f32 %v188, %v727
        %729 = vmatpush.msra.mxu0 %v728
        %v730 = vand.u32 %v186, 4294901760
        %v731 = vsub.f32 %v186, %v730
        %732 = vmatpush.msra.mxu0 %v731
        %v733 = vand.u32 %v184, 4294901760
        %v734 = vsub.f32 %v184, %v733
        %735 = vmatpush.msra.mxu0 %v734
        %v736 = vand.u32 %v182, 4294901760
        %v737 = vsub.f32 %v182, %v736
        %738 = vmatpush.msra.mxu0 %v737
        %v739 = vand.u32 %v180, 4294901760
        %v740 = vsub.f32 %v180, %v739
        %741 = vmatpush.msra.mxu0 %v740
        %v742 = vand.u32 %v178, 4294901760
        %v743 = vsub.f32 %v178, %v742
        %744 = vmatmul.f32.gmra.mxu0 %v743
        %v745 = vpop.f32.mrf.mxu0
        %v746 = vadd.f32 %v692, %v745
        %747 = vdwg.mxu0
        %v748 = vand.u32 %v210, 4294901760
        %749 = vmatpush.msra.mxu0 %v748
        %v750 = vand.u32 %v208, 4294901760
        %751 = vmatpush.msra.mxu0 %v750
        %v752 = vand.u32 %v206, 4294901760
        %753 = vmatpush.msra.mxu0 %v752
        %v754 = vand.u32 %v204, 4294901760
        %755 = vmatpush.msra.mxu0 %v754
        %v756 = vand.u32 %v202, 4294901760
        %757 = vmatpush.msra.mxu0 %v756
        %v758 = vand.u32 %v200, 4294901760
        %759 = vmatpush.msra.mxu0 %v758
        %v760 = vand.u32 %v198, 4294901760
        %761 = vmatpush.msra.mxu0 %v760
        %v762 = vand.u32 %v196, 4294901760
        %763 = vmatpush.msra.mxu0 %v762
        %v764 = vand.u32 %v194, 4294901760
        %765 = vmatpush.msra.mxu0 %v764
        %v766 = vand.u32 %v192, 4294901760
        %767 = vmatpush.msra.mxu0 %v766
        %v768 = vand.u32 %v190, 4294901760
        %769 = vmatpush.msra.mxu0 %v768
        %v770 = vand.u32 %v188, 4294901760
        %771 = vmatpush.msra.mxu0 %v770
        %v772 = vand.u32 %v186, 4294901760
        %773 = vmatpush.msra.mxu0 %v772
        %v774 = vand.u32 %v184, 4294901760
        %775 = vmatpush.msra.mxu0 %v774
        %v776 = vand.u32 %v182, 4294901760
        %777 = vmatpush.msra.mxu0 %v776
        %v778 = vand.u32 %v180, 4294901760
        %779 = vmatpush.msra.mxu0 %v778
        %v780 = vand.u32 %v178, 4294901760
        %v781 = vsub.f32 %v178, %v780
        %v782 = vand.u32 %v781, 4294901760
        %783 = vmatmul.f32.gmra.mxu0 %v782
        %v784 = vpop.f32.mrf.mxu0
        %v785 = vadd.f32 %v746, %v784
        %786 = vdwg.mxu0
        %v787 = vand.u32 %v210, 4294901760
        %v788 = vsub.f32 %v210, %v787
        %v789 = vand.u32 %v788, 4294901760
        %790 = vmatpush.msra.mxu0 %v789
        %v791 = vand.u32 %v208, 4294901760
        %v792 = vsub.f32 %v208, %v791
        %v793 = vand.u32 %v792, 4294901760
        %794 = vmatpush.msra.mxu0 %v793
        %v795 = vand.u32 %v206, 4294901760
        %v796 = vsub.f32 %v206, %v795
        %v797 = vand.u32 %v796, 4294901760
        %798 = vmatpush.msra.mxu0 %v797
        %v799 = vand.u32 %v204, 4294901760
        %v800 = vsub.f32 %v204, %v799
        %v801 = vand.u32 %v800, 4294901760
        %802 = vmatpush.msra.mxu0 %v801
        %v803 = vand.u32 %v202, 4294901760
        %v804 = vsub.f32 %v202, %v803
        %v805 = vand.u32 %v804, 4294901760
        %806 = vmatpush.msra.mxu0 %v805
        %v807 = vand.u32 %v200, 4294901760
        %v808 = vsub.f32 %v200, %v807
        %v809 = vand.u32 %v808, 4294901760
        %810 = vmatpush.msra.mxu0 %v809
        %v811 = vand.u32 %v198, 4294901760
        %v812 = vsub.f32 %v198, %v811
        %v813 = vand.u32 %v812, 4294901760
        %814 = vmatpush.msra.mxu0 %v813
        %v815 = vand.u32 %v196, 4294901760
        %v816 = vsub.f32 %v196, %v815
        %v817 = vand.u32 %v816, 4294901760
        %818 = vmatpush.msra.mxu0 %v817
        %v819 = vand.u32 %v194, 4294901760
        %v820 = vsub.f32 %v194, %v819
        %v821 = vand.u32 %v820, 4294901760
        %822 = vmatpush.msra.mxu0 %v821
        %v823 = vand.u32 %v192, 4294901760
        %v824 = vsub.f32 %v192, %v823
        %v825 = vand.u32 %v824, 4294901760
        %826 = vmatpush.msra.mxu0 %v825
        %v827 = vand.u32 %v190, 4294901760
        %v828 = vsub.f32 %v190, %v827
        %v829 = vand.u32 %v828, 4294901760
        %830 = vmatpush.msra.mxu0 %v829
        %v831 = vand.u32 %v188, 4294901760
        %v832 = vsub.f32 %v188, %v831
        %v833 = vand.u32 %v832, 4294901760
        %834 = vmatpush.msra.mxu0 %v833
        %v835 = vand.u32 %v186, 4294901760
        %v836 = vsub.f32 %v186, %v835
        %v837 = vand.u32 %v836, 4294901760
        %838 = vmatpush.msra.mxu0 %v837
        %v839 = vand.u32 %v184, 4294901760
        %v840 = vsub.f32 %v184, %v839
        %v841 = vand.u32 %v840, 4294901760
        %842 = vmatpush.msra.mxu0 %v841
        %v843 = vand.u32 %v182, 4294901760
        %v844 = vsub.f32 %v182, %v843
        %v845 = vand.u32 %v844, 4294901760
        %846 = vmatpush.msra.mxu0 %v845
        %v847 = vand.u32 %v180, 4294901760
        %v848 = vsub.f32 %v180, %v847
        %v849 = vand.u32 %v848, 4294901760
        %850 = vmatpush.msra.mxu0 %v849
        %v851 = vand.u32 %v178, 4294901760
        %852 = vmatmul.f32.gmra.mxu0 %v851
        %v853 = vpop.f32.mrf.mxu0
        %v854 = vadd.f32 %v785, %v853
        %855 = vdwg.mxu0
        %v856 = vand.u32 %v210, 4294901760
        %857 = vmatpush.msra.mxu0 %v856
        %v858 = vand.u32 %v208, 4294901760
        %859 = vmatpush.msra.mxu0 %v858
        %v860 = vand.u32 %v206, 4294901760
        %861 = vmatpush.msra.mxu0 %v860
        %v862 = vand.u32 %v204, 4294901760
        %863 = vmatpush.msra.mxu0 %v862
        %v864 = vand.u32 %v202, 4294901760
        %865 = vmatpush.msra.mxu0 %v864
        %v866 = vand.u32 %v200, 4294901760
        %867 = vmatpush.msra.mxu0 %v866
        %v868 = vand.u32 %v198, 4294901760
        %869 = vmatpush.msra.mxu0 %v868
        %v870 = vand.u32 %v196, 4294901760
        %871 = vmatpush.msra.mxu0 %v870
        %v872 = vand.u32 %v194, 4294901760
        %873 = vmatpush.msra.mxu0 %v872
        %v874 = vand.u32 %v192, 4294901760
        %875 = vmatpush.msra.mxu0 %v874
        %v876 = vand.u32 %v190, 4294901760
        %877 = vmatpush.msra.mxu0 %v876
        %v878 = vand.u32 %v188, 4294901760
        %879 = vmatpush.msra.mxu0 %v878
        %v880 = vand.u32 %v186, 4294901760
        %881 = vmatpush.msra.mxu0 %v880
        %v882 = vand.u32 %v184, 4294901760
        %883 = vmatpush.msra.mxu0 %v882
        %v884 = vand.u32 %v182, 4294901760
        %885 = vmatpush.msra.mxu0 %v884
        %v886 = vand.u32 %v180, 4294901760
        %887 = vmatpush.msra.mxu0 %v886
        %v888 = vand.u32 %v178, 4294901760
        %889 = vmatmul.f32.gmra.mxu0 %v888
        %v890 = vpop.f32.mrf.mxu0
        %v891 = vadd.f32 %v854, %v890
        %892 = vdwg.mxu0
        %894 = vrot.lane.b32.xlu0 %v550, 32
        %v895 = vpop.permute.xlu0 %894
        %897 = vrot.lane.b32.xlu0 %v550, 64
        %v898 = vpop.permute.xlu0 %897
        %900 = vrot.lane.b32.xlu0 %v550, 96
        %v901 = vpop.permute.xlu0 %900
        %904 = vrot.lane.b32.xlu0 %v891, 32
        %v905 = vpop.permute.xlu0 %904
        %907 = vrot.lane.b32.xlu0 %v891, 64
        %v908 = vpop.permute.xlu0 %907
        %910 = vrot.lane.b32.xlu0 %v891, 96
        %v911 = vpop.permute.xlu0 %910
        %vm913 = vcmask 261120
        %v914 = vsel %vm913, %v550, %v895
        %vm915 = vcmask 523264
        %v916 = vsel %vm915, %v914, %v895
        %vm917 = vcmask 785408
        %v918 = vsel %vm917, %v916, %v898
        %v919 = vsel %vm913, %v898, %v901
        %v920 = vsel %vm915, %v919, %v901
        %v921 = vsel %vm917, %v920, %v550
        %v922 = vsel %vm913, %v891, %v905
        %v923 = vsel %vm915, %v922, %v905
        %v924 = vsel %vm917, %v923, %v908
        %v925 = vsel %vm913, %v908, %v911
        %v926 = vsel %vm915, %v925, %v911
        %v927 = vsel %vm917, %v926, %v891
        %928 = vst [vmem:[%s177] sm:$0xff] %v918
        %929 = vst [vmem:[%s177 + $0x8] sm:$0xff] %v921
        %930 = vst [vmem:[%s177 + $0x10] sm:$0xff] %v924
        %931 = vst [vmem:[%s177 + $0x18] sm:$0xff] %v927
        %s932 = sand.u32 %s75, 1
        %s933 = scalar_lea.sflag [#allocation4], %s932
        %s934 = sand.u32 %s75, 1
        %s935 = smul.addr %s934, 32
        %s936 = scalar_lea.vmem [#allocation7], %s935
        // Predicated region
        $region37: #{tpu_custom_call.1} parent=27 // pred_check
          %p937 = pneg %p85
        $region38: #{tpu_custom_call.1} parent=27 // pred_check_branch
          %939 = sbr.rel (%p937) target = $region40
        $region39: #{tpu_custom_call.1} parent=27 // pred_region
          %941 = vsyncadd %s933, 0
          %s942 = smul.addr %s20, 4
          %s943 = smul.addr %s942, 8
          %s944 = scalar_lea.hbm %s2, %s943
          %s946 = sshll.u32 %s936, 4
          %s947 = int_to_ptr.vmem [resolvable:$true] %s946
          %s948 = sshll.u32 %s944, 4
          %s949 = int_to_ptr.hbm [resolvable:$true] %s948
          %951 = dma.vmem_to_hbm [thread:$0]  %s947, 512, %s949, %s933
        $region40: #{tpu_custom_call.1} parent=27 // pred_fallthru
          _
      $region28: #{tpu_custom_call.1} parent=5 // pred_fallthru
        _
      %p952 = scmp.le.s32.totalorder 2, %s15
      // Predicated region
      $region41: #{tpu_custom_call.1} parent=5 // pred_check
        %p953 = pneg %p952
      $region42: #{tpu_custom_call.1} parent=5 // pred_check_branch
        %955 = sbr.rel (%p953) target = $region44
      $region43: #{tpu_custom_call.1} parent=5 // pred_region
        %s956 = ssub.s32 %s15, 2
        // Predicated region
        $region45: #{tpu_custom_call.1} parent=43 // pred_check
          %p957 = pneg %p91
        $region46: #{tpu_custom_call.1} parent=43 // pred_check_branch
          %959 = sbr.rel (%p957) target = $region48
        $region47: #{tpu_custom_call.1} parent=43 // pred_region
          %s960 = sand.u32 %s76, 1
          %s961 = scalar_lea.sflag [#allocation4], %s960
          %s962 = sand.u32 %s76, 1
          %s963 = smul.addr %s962, 32
          %s964 = scalar_lea.vmem [#allocation7], %s963
          %966 = dma.done %s961, 512
        $region48: #{tpu_custom_call.1} parent=43 // pred_fallthru
          _
      $region44: #{tpu_custom_call.1} parent=5 // pred_fallthru
        _
    $region6: #{tpu_custom_call.1} parent=1 // loop_footer
      %s19 = sadd.s32 1, %s15
    $region7: #{tpu_custom_call.1} parent=1 // loop_footer_branch
      %14 = sbr.rel target = $region3
    $region8: #{tpu_custom_call.1} parent=1 // loop_exit
      _
    %967 = vsyncpa [#allocation3], 1
    %s968 = scalar_lea.sflag [#allocation3], 1
    %969 = vsyncpa %s968, 1
    %970 = vsyncpa [#allocation6], 1
    %971 = vsyncpa [#allocation4], 1
    %s972 = scalar_lea.sflag [#allocation4], 1
    %973 = vsyncpa %s972, 1

</llo_original>
